<compile_context>
chip_gen: v5e
topology: v5e:2x2
jax: 0.10.0
libtpu: 0.0.40
codegen_flags: <defaults>
</compile_context>

<pallas_src>
import jax
import jax.numpy as jnp
from jax import lax
from jax.experimental import pallas as pl
from jax.experimental.pallas import tpu as pltpu

EPS = 1e-5   # nn.GroupNorm default eps
KS = 3       # ModelConfig.kernel_size
INV_SQRT2 = 0.7071067811865475


def _make_kernel(BB, C, H, W):
    HW = H * W
    N = BB * HW
    inv_n = 1.0 / float(C * HW)

    def kernel(x_ref, wg_ref, pp_ref, mask_ref, o_ref, col_ref):
        # x_ref:    (C, N)   raw input, batch folded into lanes (N = BB*HW)
        # wg_ref:   (C, 9C)  gamma-folded conv weight, columns ordered (tap, ci)
        # pp_ref:   (C, 4)   packed per-channel params [S, Bconst, alfa, beta]
        # mask_ref: (1, N)   interior mask (0 on the ConstantPad2d border)
        # o_ref:    (C, N)   output slab
        # col_ref:  (9C, N)  VMEM scratch: im2col built from in-kernel rolls
        x2 = x_ref[...].astype(jnp.float32)                        # (C, N)

        # --- 9 shifted taps written straight into their im2col rows (no
        # concatenate / duplicate tap materialization).  Wrap-around only
        # hits first/last image rows, zeroed by the mask below. ---
        for di in range(KS):
            for dj in range(KS):
                t = di * KS + dj
                off = (di - 1) * W + (dj - 1)
                tap = x2 if off == 0 else pltpu.roll(x2, (-off) % N, 1)
                col_ref[t * C:(t + 1) * C, :] = tap

        # --- per-sample GroupNorm statistics: only the scalars are needed
        # (normalization itself is folded into the conv weights). ---
        sq = x2 * x2
        rstd_rows, mr_rows = [], []
        for b in range(BB):
            sl = slice(b * HW, (b + 1) * HW)                       # lane-aligned
            s1 = jnp.sum(x2[:, sl], axis=(0, 1), keepdims=True)    # (1,1)
            s2 = jnp.sum(sq[:, sl], axis=(0, 1), keepdims=True)
            mean = s1 * inv_n
            var = s2 * inv_n - mean * mean                         # single pass
            rstd = lax.rsqrt(var + EPS)
            rstd_rows.append(jnp.broadcast_to(rstd, (1, HW)))
            mr_rows.append(jnp.broadcast_to(rstd * mean, (1, HW)))
        rstd_map = jnp.concatenate(rstd_rows, axis=1)              # (1, N)
        mr_map = jnp.concatenate(mr_rows, axis=1)                  # (1, N)

        # --- one MXU dot for the whole block ---
        raw = jnp.dot(wg_ref[...], col_ref[...],
                      preferred_element_type=jnp.float32)          # (C, N)

        pp = pp_ref[...].astype(jnp.float32)
        S, Bc = pp[:, 0:1], pp[:, 1:2]
        alfa, beta = pp[:, 2:3], pp[:, 3:4]

        # GroupNorm-folded conv + VALID-conv / ConstantPad2d border zeroing
        conv = (rstd_map * raw - mr_map * S + Bc) * mask_ref[...]
        # exact GELU (erf form, matches nn.GELU default); gelu(0)=0 at border
        y = 0.5 * conv * (1.0 + lax.erf(conv * INV_SQRT2))
        # rezero + reskip, single wide lane-dense store
        o_ref[...] = (alfa * y + beta * x2).astype(o_ref.dtype)

    return kernel


def _pick_bb(B, C, HW):
    """Samples per grid block.  No divisor constraint (batch is padded to a
    multiple of BB).  VMEM budget uses the post-fix working set (double-
    buffered in/out blocks + 9C im2col scratch + temps), conservative for
    v7x's 32 MiB scoped / 64 MiB physical VMEM.  Keeps >=2 grid blocks when
    B>=2 so both v7x TensorCores get work."""
    per_sample_bytes = 17 * C * HW * 4
    bb = max(1, min(8, (20 << 20) // per_sample_bytes))
    if B >= 2:
        bb = min(bb, -(-B // 2))       # at least 2 blocks for 2-TC chips
    return max(1, min(bb, B))


def filter_block(x_nchw, params):
    """Pallas FilterBlock.forward.  Input/output are NCHW like PyTorch."""
    wconv, bconv = params["w"], params["b"]
    gamma, bnorm = params["gamma"], params["bnorm"]
    alfa, beta = params["alfa"], params["beta"]

    B, C, H, W = x_nchw.shape
    HW = H * W
    BB = _pick_bb(B, C, HW)
    grid_b = -(-B // BB)
    B_pad = grid_b * BB
    N = BB * HW
    f32 = jnp.float32

    # batch into the lane dimension: (B,C,H,W) -> (C, B_pad*HW) (layout plumbing)
    xp = x_nchw
    if B_pad != B:
        xp = jnp.pad(xp, ((0, B_pad - B), (0, 0), (0, 0), (0, 0)))
    x2 = jnp.transpose(xp, (1, 0, 2, 3)).reshape(C, B_pad * HW)

    # Fold GroupNorm through the conv:
    #   conv(GN(x)) = rstd * (Wg @ im2col(x)) - rstd*mean*S + Bconst
    wg4 = wconv.astype(f32) * gamma.astype(f32).reshape(1, C, 1, 1)
    wg = jnp.transpose(wg4, (0, 2, 3, 1)).reshape(C, KS * KS * C)   # cols (tap, ci)
    S = jnp.sum(wg, axis=1)                                         # (C,)
    bconst = jnp.sum(wconv.astype(f32) * bnorm.astype(f32).reshape(1, C, 1, 1),
                     axis=(1, 2, 3)) + bconv.astype(f32)            # (C,)
    pp = jnp.stack([S, bconst, alfa.astype(f32), beta.astype(f32)], axis=1)  # (C,4)

    # interior mask (VALID conv + ConstantPad2d border), host-side, no div/mod
    m2d = jnp.zeros((H, W), f32)
    if H > 2 and W > 2:
        m2d = m2d.at[1:H - 1, 1:W - 1].set(1.0)
    mask = jnp.tile(m2d.reshape(1, HW), (1, BB))                    # (1, N)

    kernel = _make_kernel(BB, C, H, W)
    cost = pl.CostEstimate(
        flops=int(B_pad * HW * (2 * C * KS * KS * C + 30 * C)),
        transcendentals=int(B_pad * C * HW),
        bytes_accessed=int(2 * B_pad * C * HW * 4 + wg.size * 4 + pp.size * 4))

    out = pl.pallas_call(
        kernel,
        out_shape=jax.ShapeDtypeStruct((C, B_pad * HW), x_nchw.dtype),
        grid=(grid_b,),
        in_specs=[
            pl.BlockSpec((C, N), lambda i: (0, i)),              # x (batch in lanes)
            pl.BlockSpec((C, KS * KS * C), lambda i: (0, 0)),    # folded conv weight
            pl.BlockSpec((C, 4), lambda i: (0, 0)),              # packed per-channel params
            pl.BlockSpec((1, N), lambda i: (0, 0)),              # interior mask
        ],
        out_specs=pl.BlockSpec((C, N), lambda i: (0, i)),
        scratch_shapes=[pltpu.VMEM((KS * KS * C, N), jnp.float32)],  # im2col
        compiler_params=pltpu.CompilerParams(
            dimension_semantics=("parallel",)),
        cost_estimate=cost,
    )(x2, wg, pp, mask)

    out = jnp.transpose(out.reshape(C, B_pad, H, W), (1, 0, 2, 3))[:B]
    return out


def filter_block_reference(x, params):
    """Pure-JAX reference of the PyTorch forward (for correctness check)."""
    wconv, bconv = params["w"], params["b"]
    gamma, bnorm = params["gamma"], params["bnorm"]
    alfa, beta = params["alfa"], params["beta"]
    B, C, H, W = x.shape
    mean = jnp.mean(x, axis=(1, 2, 3), keepdims=True)
    var = jnp.mean((x - mean) ** 2, axis=(1, 2, 3), keepdims=True)
    xn = (x - mean) * lax.rsqrt(var + EPS)
    xn = xn * gamma.reshape(1, C, 1, 1) + bnorm.reshape(1, C, 1, 1)
    yv = lax.conv_general_dilated(
        xn, wconv, (1, 1), "VALID",
        dimension_numbers=("NCHW", "OIHW", "NCHW"))
    yv = yv + bconv.reshape(1, C, 1, 1)
    y = jnp.pad(yv, ((0, 0), (0, 0), (1, 1), (1, 1)))
    y = 0.5 * y * (1.0 + jax.scipy.special.erf(y / jnp.sqrt(2.0)))
    return alfa.reshape(1, C, 1, 1) * y + beta.reshape(1, C, 1, 1) * x


if __name__ == "__main__":
    key = jax.random.PRNGKey(0)
    kx, kw, kb, kg, kbn, ka, kbt, kx2, kx3 = jax.random.split(key, 9)
    B, C, H, W = 2, 8, 16, 16   # batch, capacity (=8 default), spatial
    x = jax.random.normal(kx, (B, C, H, W), jnp.float32)
    params = {
        "w": 0.1 * jax.random.normal(kw, (C, C, KS, KS), jnp.float32),
        "b": 0.1 * jax.random.normal(kb, (C,), jnp.float32),
        "gamma": 1.0 + 0.1 * jax.random.normal(kg, (C,), jnp.float32),
        "bnorm": 0.1 * jax.random.normal(kbn, (C,), jnp.float32),
        "alfa": 1.0 + 0.1 * jax.random.normal(ka, (C,), jnp.float32),
        "beta": 0.1 * jax.random.normal(kbt, (C,), jnp.float32),
    }

    out = jax.block_until_ready(filter_block(x, params))
    ref = jax.block_until_ready(filter_block_reference(x, params))
    assert out.shape == x.shape and out.dtype == x.dtype
    err = float(jnp.max(jnp.abs(out - ref)))
    if not jnp.allclose(out, ref, atol=2e-2, rtol=2e-2):
        raise AssertionError(f"Pallas kernel mismatch vs reference, max err={err}")

    # BB>1 path: several samples fused into one lane-batched block / one dot
    x8 = jax.random.normal(kx2, (8, C, H, W), jnp.float32)
    out8 = jax.block_until_ready(filter_block(x8, params))
    ref8 = jax.block_until_ready(filter_block_reference(x8, params))
    err8 = float(jnp.max(jnp.abs(out8 - ref8)))
    if not jnp.allclose(out8, ref8, atol=2e-2, rtol=2e-2):
        raise AssertionError(f"Pallas kernel (batched) mismatch, max err={err8}")

    # non-divisor batch exercises the batch-padding (remainder) path
    x5 = jax.random.normal(kx3, (5, C, H, W), jnp.float32)
    out5 = jax.block_until_ready(filter_block(x5, params))
    ref5 = jax.block_until_ready(filter_block_reference(x5, params))
    err5 = float(jnp.max(jnp.abs(out5 - ref5)))
    if not jnp.allclose(out5, ref5, atol=2e-2, rtol=2e-2):
        raise AssertionError(f"Pallas kernel (odd batch) mismatch, max err={err5}")

    print("KERNEL_OK")
</pallas_src>

<mosaic_0001>
module attributes {stable_mosaic.version = 11 : i64} {
  func.func @kernel(%arg0: i32, %arg1: memref<8x256xf32, #tpu.memory_space<vmem>>, %arg2: memref<8x72xf32, #tpu.memory_space<vmem>>, %arg3: memref<8x4xf32, #tpu.memory_space<vmem>>, %arg4: memref<1x256xf32, #tpu.memory_space<vmem>>, %arg5: memref<8x256xf32, #tpu.memory_space<vmem>>, %arg6: memref<72x256xf32, #tpu.memory_space<vmem>>) attributes {dimension_semantics = [#tpu.dimension_semantics<parallel>], iteration_bounds = array<i64: 2>, scalar_prefetch = 0 : i64, scratch_operands = 1 : i64, tpu.core_type = #tpu.core_type<tc>, window_params = [{transform_indices = @transform_0, window_bounds = array<i64: 8, 256>}, {pipeline_mode = #tpu.pipeline_mode<synchronous>, transform_indices = @transform_1, window_bounds = array<i64: 8, 72>}, {pipeline_mode = #tpu.pipeline_mode<synchronous>, transform_indices = @transform_2, window_bounds = array<i64: 8, 4>}, {pipeline_mode = #tpu.pipeline_mode<synchronous>, transform_indices = @transform_3, window_bounds = array<i64: 1, 256>}, {transform_indices = @transform_4, window_bounds = array<i64: 8, 256>}]} {
    %c0 = arith.constant 0 : index
    %c0_0 = arith.constant 0 : index
    %0 = vector.load %arg1[%c0, %c0_0] : memref<8x256xf32, #tpu.memory_space<vmem>>, vector<8x256xf32>
    %c17_i32 = arith.constant 17 : i32
    %1 = tpu.dynamic_rotate %0 by %c17_i32 dim 1 : vector<8x256xf32>, i32 -> vector<8x256xf32>
    %c0_1 = arith.constant 0 : index
    %c0_2 = arith.constant 0 : index
    %2 = vector.load %arg6[%c0_1, %c0_2] : memref<72x256xf32, #tpu.memory_space<vmem>>, vector<8x256xf32>
    tpu.vector_store %arg6[%c0_1, %c0_2], %1 {strides = array<i32>} : memref<72x256xf32, #tpu.memory_space<vmem>>, vector<8x256xf32>,
    %c16_i32 = arith.constant 16 : i32
    %3 = tpu.dynamic_rotate %0 by %c16_i32 dim 1 : vector<8x256xf32>, i32 -> vector<8x256xf32>
    %c8 = arith.constant 8 : index
    %c0_3 = arith.constant 0 : index
    %4 = vector.load %arg6[%c8, %c0_3] : memref<72x256xf32, #tpu.memory_space<vmem>>, vector<8x256xf32>
    tpu.vector_store %arg6[%c8, %c0_3], %3 {strides = array<i32>} : memref<72x256xf32, #tpu.memory_space<vmem>>, vector<8x256xf32>,
    %c15_i32 = arith.constant 15 : i32
    %5 = tpu.dynamic_rotate %0 by %c15_i32 dim 1 : vector<8x256xf32>, i32 -> vector<8x256xf32>
    %c16 = arith.constant 16 : index
    %c0_4 = arith.constant 0 : index
    %6 = vector.load %arg6[%c16, %c0_4] : memref<72x256xf32, #tpu.memory_space<vmem>>, vector<8x256xf32>
    tpu.vector_store %arg6[%c16, %c0_4], %5 {strides = array<i32>} : memref<72x256xf32, #tpu.memory_space<vmem>>, vector<8x256xf32>,
    %c1_i32 = arith.constant 1 : i32
    %7 = tpu.dynamic_rotate %0 by %c1_i32 dim 1 : vector<8x256xf32>, i32 -> vector<8x256xf32>
    %c24 = arith.constant 24 : index
    %c0_5 = arith.constant 0 : index
    %8 = vector.load %arg6[%c24, %c0_5] : memref<72x256xf32, #tpu.memory_space<vmem>>, vector<8x256xf32>
    tpu.vector_store %arg6[%c24, %c0_5], %7 {strides = array<i32>} : memref<72x256xf32, #tpu.memory_space<vmem>>, vector<8x256xf32>,
    %c32 = arith.constant 32 : index
    %c0_6 = arith.constant 0 : index
    %9 = vector.load %arg6[%c32, %c0_6] : memref<72x256xf32, #tpu.memory_space<vmem>>, vector<8x256xf32>
    tpu.vector_store %arg6[%c32, %c0_6], %0 {strides = array<i32>} : memref<72x256xf32, #tpu.memory_space<vmem>>, vector<8x256xf32>,
    %c255_i32 = arith.constant 255 : i32
    %10 = tpu.dynamic_rotate %0 by %c255_i32 dim 1 : vector<8x256xf32>, i32 -> vector<8x256xf32>
    %c40 = arith.constant 40 : index
    %c0_7 = arith.constant 0 : index
    %11 = vector.load %arg6[%c40, %c0_7] : memref<72x256xf32, #tpu.memory_space<vmem>>, vector<8x256xf32>
    tpu.vector_store %arg6[%c40, %c0_7], %10 {strides = array<i32>} : memref<72x256xf32, #tpu.memory_space<vmem>>, vector<8x256xf32>,
    %c241_i32 = arith.constant 241 : i32
    %12 = tpu.dynamic_rotate %0 by %c241_i32 dim 1 : vector<8x256xf32>, i32 -> vector<8x256xf32>
    %c48 = arith.constant 48 : index
    %c0_8 = arith.constant 0 : index
    %13 = vector.load %arg6[%c48, %c0_8] : memref<72x256xf32, #tpu.memory_space<vmem>>, vector<8x256xf32>
    tpu.vector_store %arg6[%c48, %c0_8], %12 {strides = array<i32>} : memref<72x256xf32, #tpu.memory_space<vmem>>, vector<8x256xf32>,
    %c240_i32 = arith.constant 240 : i32
    %14 = tpu.dynamic_rotate %0 by %c240_i32 dim 1 : vector<8x256xf32>, i32 -> vector<8x256xf32>
    %c56 = arith.constant 56 : index
    %c0_9 = arith.constant 0 : index
    %15 = vector.load %arg6[%c56, %c0_9] : memref<72x256xf32, #tpu.memory_space<vmem>>, vector<8x256xf32>
    tpu.vector_store %arg6[%c56, %c0_9], %14 {strides = array<i32>} : memref<72x256xf32, #tpu.memory_space<vmem>>, vector<8x256xf32>,
    %c239_i32 = arith.constant 239 : i32
    %16 = tpu.dynamic_rotate %0 by %c239_i32 dim 1 : vector<8x256xf32>, i32 -> vector<8x256xf32>
    %c64 = arith.constant 64 : index
    %c0_10 = arith.constant 0 : index
    %17 = vector.load %arg6[%c64, %c0_10] : memref<72x256xf32, #tpu.memory_space<vmem>>, vector<8x256xf32>
    tpu.vector_store %arg6[%c64, %c0_10], %16 {strides = array<i32>} : memref<72x256xf32, #tpu.memory_space<vmem>>, vector<8x256xf32>,
    %18 = arith.mulf %0, %0 : vector<8x256xf32>
    %19 = vector.shape_cast %0 : vector<8x256xf32> to vector<1x8x256xf32>
    %cst = arith.constant dense<0.000000e+00> : vector<1xf32>
    %20 = vector.multi_reduction <add>, %19, %cst [1, 2] : vector<1x8x256xf32> to vector<1xf32>
    %21 = vector.shape_cast %20 : vector<1xf32> to vector<1x1x1xf32>
    %22 = vector.extract %21[0, 0, 0] : f32 from vector<1x1x1xf32>
    %23 = vector.broadcast %22 : f32 to vector<1x1xf32>
    %24 = vector.shape_cast %18 : vector<8x256xf32> to vector<1x8x256xf32>
    %cst_11 = arith.constant dense<0.000000e+00> : vector<1xf32>
    %25 = vector.multi_reduction <add>, %24, %cst_11 [1, 2] : vector<1x8x256xf32> to vector<1xf32>
    %26 = vector.shape_cast %25 : vector<1xf32> to vector<1x1x1xf32>
    %27 = vector.extract %26[0, 0, 0] : f32 from vector<1x1x1xf32>
    %28 = vector.broadcast %27 : f32 to vector<1x1xf32>
    %cst_12 = arith.constant 4.8828125E-4 : f32
    %29 = vector.broadcast %cst_12 : f32 to vector<1x1xf32>
    %30 = arith.mulf %23, %29 : vector<1x1xf32>
    %cst_13 = arith.constant 4.8828125E-4 : f32
    %31 = vector.broadcast %cst_13 : f32 to vector<1x1xf32>
    %32 = arith.mulf %28, %31 : vector<1x1xf32>
    %33 = arith.mulf %30, %30 : vector<1x1xf32>
    %34 = arith.subf %32, %33 : vector<1x1xf32>
    %cst_14 = arith.constant 9.99999974E-6 : f32
    %35 = vector.broadcast %cst_14 : f32 to vector<1x1xf32>
    %36 = arith.addf %34, %35 : vector<1x1xf32>
    %37 = math.rsqrt %36 : vector<1x1xf32>
    %38 = vector.shape_cast %37 : vector<1x1xf32> to vector<1x1xf32>
    %39 = vector.broadcast %38 : vector<1x1xf32> to vector<1x256xf32>
    %40 = arith.mulf %37, %30 : vector<1x1xf32>
    %41 = vector.shape_cast %40 : vector<1x1xf32> to vector<1x1xf32>
    %42 = vector.broadcast %41 : vector<1x1xf32> to vector<1x256xf32>
    %c0_15 = arith.constant 0 : index
    %c0_16 = arith.constant 0 : index
    %43 = vector.load %arg2[%c0_15, %c0_16] : memref<8x72xf32, #tpu.memory_space<vmem>>, vector<8x72xf32>
    %c0_17 = arith.constant 0 : index
    %c0_18 = arith.constant 0 : index
    %44 = vector.load %arg6[%c0_17, %c0_18] : memref<72x256xf32, #tpu.memory_space<vmem>>, vector<72x256xf32>
    %cst_19 = arith.constant dense<0.000000e+00> : vector<8x256xf32>
    %45 = tpu.matmul %43, %44, %cst_19 {dimension_numbers = #tpu.dot_dimension_numbers<[1], [0], [0], [1], [0, 0, 1, 1], [], []>} : vector<8x72xf32>, vector<72x256xf32>, vector<8x256xf32> -> vector<8x256xf32>
    %c0_20 = arith.constant 0 : index
    %c0_21 = arith.constant 0 : index
    %46 = vector.load %arg3[%c0_20, %c0_21] : memref<8x4xf32, #tpu.memory_space<vmem>>, vector<8x4xf32>
    %47 = vector.extract_strided_slice %46 {offsets = [0, 0], sizes = [8, 1], strides = [1, 1]} : vector<8x4xf32> to vector<8x1xf32>
    %48 = vector.extract_strided_slice %46 {offsets = [0, 1], sizes = [8, 1], strides = [1, 1]} : vector<8x4xf32> to vector<8x1xf32>
    %49 = vector.extract_strided_slice %46 {offsets = [0, 2], sizes = [8, 1], strides = [1, 1]} : vector<8x4xf32> to vector<8x1xf32>
    %50 = vector.extract_strided_slice %46 {offsets = [0, 3], sizes = [8, 1], strides = [1, 1]} : vector<8x4xf32> to vector<8x1xf32>
    %51 = vector.broadcast %39 : vector<1x256xf32> to vector<8x256xf32>
    %52 = arith.mulf %51, %45 : vector<8x256xf32>
    %53 = vector.broadcast %42 : vector<1x256xf32> to vector<8x256xf32>
    %54 = vector.broadcast %47 : vector<8x1xf32> to vector<8x256xf32>
    %55 = arith.mulf %53, %54 : vector<8x256xf32>
    %56 = arith.subf %52, %55 : vector<8x256xf32>
    %57 = vector.broadcast %48 : vector<8x1xf32> to vector<8x256xf32>
    %58 = arith.addf %56, %57 : vector<8x256xf32>
    %c0_22 = arith.constant 0 : index
    %c0_23 = arith.constant 0 : index
    %59 = vector.load %arg4[%c0_22, %c0_23] : memref<1x256xf32, #tpu.memory_space<vmem>>, vector<1x256xf32>
    %60 = vector.broadcast %59 : vector<1x256xf32> to vector<8x256xf32>
    %61 = arith.mulf %58, %60 : vector<8x256xf32>
    %cst_24 = arith.constant 5.000000e-01 : f32
    %62 = vector.broadcast %cst_24 : f32 to vector<8x256xf32>
    %63 = arith.mulf %62, %61 : vector<8x256xf32>
    %cst_25 = arith.constant 0.707106769 : f32
    %64 = vector.broadcast %cst_25 : f32 to vector<8x256xf32>
    %65 = arith.mulf %61, %64 : vector<8x256xf32>
    %66 = math.erf %65 : vector<8x256xf32>
    %cst_26 = arith.constant 1.000000e+00 : f32
    %67 = vector.broadcast %cst_26 : f32 to vector<8x256xf32>
    %68 = arith.addf %67, %66 : vector<8x256xf32>
    %69 = arith.mulf %63, %68 : vector<8x256xf32>
    %70 = vector.broadcast %49 : vector<8x1xf32> to vector<8x256xf32>
    %71 = arith.mulf %70, %69 : vector<8x256xf32>
    %72 = vector.broadcast %50 : vector<8x1xf32> to vector<8x256xf32>
    %73 = arith.mulf %72, %0 : vector<8x256xf32>
    %74 = arith.addf %71, %73 : vector<8x256xf32>
    %c0_27 = arith.constant 0 : index
    %c0_28 = arith.constant 0 : index
    %75 = vector.load %arg5[%c0_27, %c0_28] : memref<8x256xf32, #tpu.memory_space<vmem>>, vector<8x256xf32>
    tpu.vector_store %arg5[%c0_27, %c0_28], %74 {strides = array<i32>} : memref<8x256xf32, #tpu.memory_space<vmem>>, vector<8x256xf32>,
    return
  }
  func.func @transform_0(%arg0: i32) -> (i32, i32) {
    %c0_i32 = arith.constant 0 : i32
    %c0_i32_0 = arith.constant 0 : i32
    return %c0_i32, %arg0 : i32, i32
  }
  func.func @transform_1(%arg0: i32) -> (i32, i32) {
    %c0_i32 = arith.constant 0 : i32
    %c0_i32_0 = arith.constant 0 : i32
    %c0_i32_1 = arith.constant 0 : i32
    return %c0_i32, %c0_i32_0 : i32, i32
  }
  func.func @transform_2(%arg0: i32) -> (i32, i32) {
    %c0_i32 = arith.constant 0 : i32
    %c0_i32_0 = arith.constant 0 : i32
    %c0_i32_1 = arith.constant 0 : i32
    return %c0_i32, %c0_i32_0 : i32, i32
  }
  func.func @transform_3(%arg0: i32) -> (i32, i32) {
    %c0_i32 = arith.constant 0 : i32
    %c0_i32_0 = arith.constant 0 : i32
    %c0_i32_1 = arith.constant 0 : i32
    return %c0_i32, %c0_i32_0 : i32, i32
  }
  func.func @transform_4(%arg0: i32) -> (i32, i32) {
    %c0_i32 = arith.constant 0 : i32
    %c0_i32_0 = arith.constant 0 : i32
    return %c0_i32, %arg0 : i32, i32
  }
}

</mosaic_0001>

<llo_original>
// kernel: tpu_custom_call.1
$region0: #{tpu_custom_call.1}
  #allocation0 [shape = 'u32[]', space=smem, size = 0x4, offset = 0x4, fixed_abs, tag = 'smem constant byte address 0x4 - core index']
  #allocation1 [shape = 'u32[72,128]{1,0:T(1,128)}', space=vmem, size = 0x9000, scoped, tag = 'internal scratch']
  #allocation2 [shape = 'f32[72,256]{1,0:T(8,128)}', space=vmem, size = 0x12000, scoped, tag = 'scratch operand']
  %s0 = inlined_call_operand.hbm [shape: f32[8,512], index: 0, kind: input, shape index: {}]
  %s1 = inlined_call_operand.vmem [shape: f32[8,72], index: 1, kind: input, shape index: {}]
  %s2 = inlined_call_operand.vmem [shape: f32[8,4], index: 2, kind: input, shape index: {}]
  %s3 = inlined_call_operand.vmem [shape: f32[1,256], index: 3, kind: input, shape index: {}]
  %s4 = inlined_call_operand.hbm [shape: f32[8,512], index: 4, kind: output, shape index: {}]
  %s5 = sld [smem:[#allocation0]]
  $region53: #{tpu_custom_call.1} parent=0
    _
  %s7 = ssub.s32 1, %s5
  %s8 = scalar_select 0, %s7, %s5
  $region1: #{tpu_custom_call.1} parent=0
    #allocation3 [shape = 'u8[16384]{0}', space=vmem, size = 0x4000, scoped, tag = 'input window, operand 0']
    #allocation4 [shape = 's32[2]{0}', space=sflag, size = 0x8, scoped, tag = 'scoped memory for tpu_custom_call.1']
    #allocation5 [shape = 's32[2]{0}', space=sflag, size = 0x8, scoped, tag = 'scoped memory for tpu_custom_call.1']
    #allocation6 [shape = 'u8[16384]{0}', space=vmem, size = 0x4000, scoped, tag = 'output window, operand 0']
    %9 = vsyncpa [#allocation4], 0
    %s10 = scalar_lea.sflag [#allocation4], 1
    %11 = vsyncpa %s10, 0
    %12 = vsyncpa [#allocation5], 0
    %s13 = scalar_lea.sflag [#allocation5], 1
    %14 = vsyncpa %s13, 0
    loop: start=0, step=1, limit=4
    $region2: #{tpu_custom_call.1} parent=1 // loop_pre_header
      _
    $region3: #{tpu_custom_call.1} parent=1 // loop_header
      %s16 = sphi 0, %s20
      %p17 = scmp.ge.s32.totalorder %s16, 4
      %s26 = sphi 0, %s28
      %s29 = sphi 0, %s26
      %s30 = sphi 0, %s29
      %s46 = sphi 0, %s30
      %s50 = sphi 0, %s50
      %s52 = sphi 0, %s50
      %s53 = sphi 0, %s52
      %s67 = sphi 0, %s53
      %s71 = sphi 0, %s71
      %s73 = sphi 0, %s71
      %s74 = sphi 0, %s73
      %s88 = sphi 0, %s74
      %s92 = sphi 0, %s92
      %s94 = sphi 0, %s92
      %s95 = sphi 0, %s94
      %s109 = sphi 0, %s95
      %s115 = sphi 0, %s117
      %s118 = sphi 0, %s115
      %s119 = sphi 0, %s118
      %s135 = sphi 0, %s119
    $region4: #{tpu_custom_call.1} parent=1 // loop_header_branch
      %19 = sbr.rel (%p17) target = $region8
    $region5: #{tpu_custom_call.1} parent=1 // loop_body
      %s21 = ssub.s32 %s16, 1
      %s22 = ssub.s32 %s16, 2
      %s23 = sadd.s32 %s16, 1
      %s24 = ssub.s32 %s16, %s23
      %p25 = scmp.eq.s32.totalorder %s24, 0
      %s27 = sadd.s32 %s26, 1
      %s28 = scalar_select %p25, %s26, %s27
      %p31 = pneg %p25
      %p32 = scmp.eq.s32.totalorder %s16, 1
      %p33 = por %p31, %p32
      %p34 = scmp.ne.s32.totalorder %s26, %s29
      %p35 = scmp.eq.s32.totalorder %s16, 0
      %p36 = por %p34, %p35
      %p37 = scmp.ne.s32.totalorder %s26, %s29
      %p38 = scmp.eq.s32.totalorder %s21, 1
      %p39 = por %p37, %p38
      %p40 = scmp.ne.s32.totalorder %s29, %s30
      %p41 = scmp.eq.s32.totalorder %s21, 0
      %p42 = por %p40, %p41
      %p43 = scmp.ne.s32.totalorder %s29, %s30
      %p44 = scmp.eq.s32.totalorder %s22, 1
      %p45 = por %p43, %p44
      %p47 = scmp.ne.s32.totalorder %s30, %s46
      %p48 = scmp.eq.s32.totalorder %s22, 0
      %p49 = por %p47, %p48
      %s51 = sadd.s32 %s50, 1
      %p54 = scmp.eq.s32.totalorder %s16, 1
      %p55 = scmp.ne.s32.totalorder %s50, %s52
      %p56 = scmp.eq.s32.totalorder %s16, 0
      %p57 = por %p55, %p56
      %p58 = scmp.ne.s32.totalorder %s50, %s52
      %p59 = scmp.eq.s32.totalorder %s21, 1
      %p60 = por %p58, %p59
      %p61 = scmp.ne.s32.totalorder %s52, %s53
      %p62 = scmp.eq.s32.totalorder %s21, 0
      %p63 = por %p61, %p62
      %p64 = scmp.ne.s32.totalorder %s52, %s53
      %p65 = scmp.eq.s32.totalorder %s22, 1
      %p66 = por %p64, %p65
      %p68 = scmp.ne.s32.totalorder %s53, %s67
      %p69 = scmp.eq.s32.totalorder %s22, 0
      %p70 = por %p68, %p69
      %s72 = sadd.s32 %s71, 1
      %p75 = scmp.eq.s32.totalorder %s16, 1
      %p76 = scmp.ne.s32.totalorder %s71, %s73
      %p77 = scmp.eq.s32.totalorder %s16, 0
      %p78 = por %p76, %p77
      %p79 = scmp.ne.s32.totalorder %s71, %s73
      %p80 = scmp.eq.s32.totalorder %s21, 1
      %p81 = por %p79, %p80
      %p82 = scmp.ne.s32.totalorder %s73, %s74
      %p83 = scmp.eq.s32.totalorder %s21, 0
      %p84 = por %p82, %p83
      %p85 = scmp.ne.s32.totalorder %s73, %s74
      %p86 = scmp.eq.s32.totalorder %s22, 1
      %p87 = por %p85, %p86
      %p89 = scmp.ne.s32.totalorder %s74, %s88
      %p90 = scmp.eq.s32.totalorder %s22, 0
      %p91 = por %p89, %p90
      %s93 = sadd.s32 %s92, 1
      %p96 = scmp.eq.s32.totalorder %s16, 1
      %p97 = scmp.ne.s32.totalorder %s92, %s94
      %p98 = scmp.eq.s32.totalorder %s16, 0
      %p99 = por %p97, %p98
      %p100 = scmp.ne.s32.totalorder %s92, %s94
      %p101 = scmp.eq.s32.totalorder %s21, 1
      %p102 = por %p100, %p101
      %p103 = scmp.ne.s32.totalorder %s94, %s95
      %p104 = scmp.eq.s32.totalorder %s21, 0
      %p105 = por %p103, %p104
      %p106 = scmp.ne.s32.totalorder %s94, %s95
      %p107 = scmp.eq.s32.totalorder %s22, 1
      %p108 = por %p106, %p107
      %p110 = scmp.ne.s32.totalorder %s95, %s109
      %p111 = scmp.eq.s32.totalorder %s22, 0
      %p112 = por %p110, %p111
      %s113 = ssub.s32 %s16, %s23
      %p114 = scmp.eq.s32.totalorder %s113, 0
      %s116 = sadd.s32 %s115, 1
      %s117 = scalar_select %p114, %s115, %s116
      %p120 = pneg %p114
      %p121 = scmp.eq.s32.totalorder %s16, 1
      %p122 = por %p120, %p121
      %p123 = scmp.ne.s32.totalorder %s115, %s118
      %p124 = scmp.eq.s32.totalorder %s16, 0
      %p125 = por %p123, %p124
      %p126 = scmp.ne.s32.totalorder %s115, %s118
      %p127 = scmp.eq.s32.totalorder %s21, 1
      %p128 = por %p126, %p127
      %p129 = scmp.ne.s32.totalorder %s118, %s119
      %p130 = scmp.eq.s32.totalorder %s21, 0
      %p131 = por %p129, %p130
      %p132 = scmp.ne.s32.totalorder %s118, %s119
      %p133 = scmp.eq.s32.totalorder %s22, 1
      %p134 = por %p132, %p133
      %p136 = scmp.ne.s32.totalorder %s119, %s135
      %p137 = scmp.eq.s32.totalorder %s22, 0
      %p138 = por %p136, %p137
      %p139 = scmp.le.s32.totalorder 1, %s16
      %p140 = scmp.lt.s32.totalorder %s16, 3
      %p141 = pnand %p139, %p140
      %p142 = pneg %p141
      // Predicated region
      $region9: #{tpu_custom_call.1} parent=5 // pred_check
        _
      $region10: #{tpu_custom_call.1} parent=5 // pred_check_branch
        %144 = sbr.rel (%p141) target = $region12
      $region11: #{tpu_custom_call.1} parent=5 // pred_region
        %s145 = ssub.s32 %s16, 1
        // Predicated region
        $region13: #{tpu_custom_call.1} parent=11 // pred_check
          %p146 = pneg %p63
        $region14: #{tpu_custom_call.1} parent=11 // pred_check_branch
          %148 = sbr.rel (%p146) target = $region16
        $region15: #{tpu_custom_call.1} parent=11 // pred_region
          _
        $region16: #{tpu_custom_call.1} parent=11 // pred_fallthru
          _
        // Predicated region
        $region17: #{tpu_custom_call.1} parent=11 // pred_check
          %p149 = pneg %p84
        $region18: #{tpu_custom_call.1} parent=11 // pred_check_branch
          %151 = sbr.rel (%p149) target = $region20
        $region19: #{tpu_custom_call.1} parent=11 // pred_region
          _
        $region20: #{tpu_custom_call.1} parent=11 // pred_fallthru
          _
        // Predicated region
        $region21: #{tpu_custom_call.1} parent=11 // pred_check
          %p152 = pneg %p105
        $region22: #{tpu_custom_call.1} parent=11 // pred_check_branch
          %154 = sbr.rel (%p152) target = $region24
        $region23: #{tpu_custom_call.1} parent=11 // pred_region
          _
        $region24: #{tpu_custom_call.1} parent=11 // pred_fallthru
          _
      $region12: #{tpu_custom_call.1} parent=5 // pred_fallthru
        _
      %p155 = scmp.lt.s32.totalorder %s16, 2
      // Predicated region
      $region25: #{tpu_custom_call.1} parent=5 // pred_check
        %p156 = pneg %p155
      $region26: #{tpu_custom_call.1} parent=5 // pred_check_branch
        %158 = sbr.rel (%p156) target = $region28
      $region27: #{tpu_custom_call.1} parent=5 // pred_region
        // Predicated region
        $region29: #{tpu_custom_call.1} parent=27 // pred_check
          %p159 = pneg %p36
        $region30: #{tpu_custom_call.1} parent=27 // pred_check_branch
          %161 = sbr.rel (%p159) target = $region32
        $region31: #{tpu_custom_call.1} parent=27 // pred_region
          %s162 = sand.u32 %s26, 1
          %s163 = scalar_lea.sflag [#allocation4], %s162
          %s164 = sand.u32 %s26, 1
          %s165 = smul.addr %s164, 16
          %s166 = scalar_lea.vmem [#allocation3], %s165
          %s167 = smul.u32 2, %s16
          %169 = vsyncadd %s163, 0
          %s170 = smul.addr %s167, 8
          %s171 = scalar_lea.hbm %s0, %s170
          %s173 = sshll.u32 %s171, 4
          %s174 = int_to_ptr.hbm [resolvable:$true] %s173
          %s175 = sshll.u32 %s166, 4
          %s176 = int_to_ptr.vmem [resolvable:$true] %s175
          %178 = dma.hbm_to_vmem [thread:$0]  %s174, 256, %s176, %s163
        $region32: #{tpu_custom_call.1} parent=27 // pred_fallthru
          _
      $region28: #{tpu_custom_call.1} parent=5 // pred_fallthru
        _
      %p179 = scmp.le.s32.totalorder 1, %s16
      %p180 = scmp.lt.s32.totalorder %s16, 3
      %p181 = pnand %p179, %p180
      %p182 = pneg %p181
      // Predicated region
      $region33: #{tpu_custom_call.1} parent=5 // pred_check
        _
      $region34: #{tpu_custom_call.1} parent=5 // pred_check_branch
        %184 = sbr.rel (%p181) target = $region36
      $region35: #{tpu_custom_call.1} parent=5 // pred_region
        %s185 = ssub.s32 %s16, 1
        %s186 = sand.u32 %s29, 1
        %s187 = scalar_lea.sflag [#allocation4], %s186
        %s188 = sand.u32 %s29, 1
        %s189 = smul.addr %s188, 16
        %s190 = scalar_lea.vmem [#allocation3], %s189
        // Predicated region
        $region37: #{tpu_custom_call.1} parent=35 // pred_check
          %p191 = pneg %p42
        $region38: #{tpu_custom_call.1} parent=35 // pred_check_branch
          %193 = sbr.rel (%p191) target = $region40
        $region39: #{tpu_custom_call.1} parent=35 // pred_region
          %195 = dma.done %s187, 256
        $region40: #{tpu_custom_call.1} parent=35 // pred_fallthru
          _
        %s196 = sand.u32 %s29, 1
        %s197 = scalar_lea.sflag [#allocation4], %s196
        %s198 = sand.u32 %s29, 1
        %s199 = smul.addr %s198, 16
        %s200 = scalar_lea.vmem [#allocation3], %s199
        %p201 = pneg %p42
        %p202 = pneg %p39
        %p203 = pneg %p63
        %p204 = pneg %p60
        %p205 = pneg %p84
        %p206 = pneg %p81
        %p207 = pneg %p105
        %p208 = pneg %p102
        %p209 = pneg %p131
        %p210 = pneg %p128
        %s211 = sand.u32 %s118, 1
        %s212 = scalar_lea.sflag [#allocation5], %s211
        %s213 = sand.u32 %s118, 1
        %s214 = smul.addr %s213, 16
        %s215 = scalar_lea.vmem [#allocation6], %s214
        %s216 = smul.u32 2, %s21
        %s217 = smul.u32 2, %s21
        %v218 = vld [vmem:[%s190] sm:$0xff]
        %v219 = vld [vmem:[%s190 + $0x8] sm:$0xff]
        %220 = vrot.lane.b32.xlu0 %v218, 17
        %v221 = vpop.permute.xlu0 %220
        %222 = vrot.lane.b32.xlu0 %v219, 17
        %v223 = vpop.permute.xlu0 %222
        %v224 = vlaneseq
        %v225 = vand.u32 %v224, 127
        %vm226 = vcmp.lt.s32.totalorder %v225, 17
        %v227 = vsel %vm226, %v221, %v223
        %v228 = vsel %vm226, %v223, %v221
        %229 = vst [vmem:[#allocation2] sm:$0xff] %v228
        %230 = vst [vmem:[#allocation2 + $0x8] sm:$0xff] %v227
        %231 = vrot.lane.b32.xlu0 %v218, 16
        %v232 = vpop.permute.xlu0 %231
        %233 = vrot.lane.b32.xlu0 %v219, 16
        %v234 = vpop.permute.xlu0 %233
        %vm235 = vcmp.lt.s32.totalorder %v225, 16
        %v236 = vsel %vm235, %v232, %v234
        %v237 = vsel %vm235, %v234, %v232
        %238 = vst [vmem:[#allocation2 + $0x10] sm:$0xff] %v237
        %239 = vst [vmem:[#allocation2 + $0x18] sm:$0xff] %v236
        %240 = vrot.lane.b32.xlu0 %v218, 15
        %v241 = vpop.permute.xlu0 %240
        %242 = vrot.lane.b32.xlu0 %v219, 15
        %v243 = vpop.permute.xlu0 %242
        %vm244 = vcmp.lt.s32.totalorder %v225, 15
        %v245 = vsel %vm244, %v241, %v243
        %v246 = vsel %vm244, %v243, %v241
        %247 = vst [vmem:[#allocation2 + $0x20] sm:$0xff] %v246
        %248 = vst [vmem:[#allocation2 + $0x28] sm:$0xff] %v245
        %249 = vrot.lane.b32.xlu0 %v218, 1
        %v250 = vpop.permute.xlu0 %249
        %251 = vrot.lane.b32.xlu0 %v219, 1
        %v252 = vpop.permute.xlu0 %251
        %vm253 = vcmp.lt.s32.totalorder %v225, 1
        %v254 = vsel %vm253, %v250, %v252
        %v255 = vsel %vm253, %v252, %v250
        %256 = vst [vmem:[#allocation2 + $0x30] sm:$0xff] %v255
        %257 = vst [vmem:[#allocation2 + $0x38] sm:$0xff] %v254
        %258 = vst [vmem:[#allocation2 + $0x40] sm:$0xff] %v218
        %259 = vst [vmem:[#allocation2 + $0x48] sm:$0xff] %v219
        %260 = vrot.lane.b32.xlu0 %v218, 127
        %v261 = vpop.permute.xlu0 %260
        %262 = vrot.lane.b32.xlu0 %v219, 127
        %v263 = vpop.permute.xlu0 %262
        %vm264 = vcmp.lt.s32.totalorder %v225, 127
        %v265 = vsel %vm264, %v261, %v263
        %v266 = vsel %vm264, %v263, %v261
        %267 = vst [vmem:[#allocation2 + $0x50] sm:$0xff] %v265
        %268 = vst [vmem:[#allocation2 + $0x58] sm:$0xff] %v266
        %269 = vrot.lane.b32.xlu0 %v218, 113
        %v270 = vpop.permute.xlu0 %269
        %271 = vrot.lane.b32.xlu0 %v219, 113
        %v272 = vpop.permute.xlu0 %271
        %vm273 = vcmp.lt.s32.totalorder %v225, 113
        %v274 = vsel %vm273, %v270, %v272
        %v275 = vsel %vm273, %v272, %v270
        %276 = vst [vmem:[#allocation2 + $0x60] sm:$0xff] %v274
        %277 = vst [vmem:[#allocation2 + $0x68] sm:$0xff] %v275
        %278 = vrot.lane.b32.xlu0 %v218, 112
        %v279 = vpop.permute.xlu0 %278
        %280 = vrot.lane.b32.xlu0 %v219, 112
        %v281 = vpop.permute.xlu0 %280
        %vm282 = vcmp.lt.s32.totalorder %v225, 112
        %v283 = vsel %vm282, %v279, %v281
        %v284 = vsel %vm282, %v281, %v279
        %285 = vst [vmem:[#allocation2 + $0x70] sm:$0xff] %v283
        %286 = vst [vmem:[#allocation2 + $0x78] sm:$0xff] %v284
        %287 = vrot.lane.b32.xlu0 %v218, 111
        %v288 = vpop.permute.xlu0 %287
        %289 = vrot.lane.b32.xlu0 %v219, 111
        %v290 = vpop.permute.xlu0 %289
        %vm291 = vcmp.lt.s32.totalorder %v225, 111
        %v292 = vsel %vm291, %v288, %v290
        %v293 = vsel %vm291, %v290, %v288
        %294 = vst [vmem:[#allocation2 + $0x80] sm:$0xff] %v292
        %295 = vst [vmem:[#allocation2 + $0x88] sm:$0xff] %v293
        %v296 = vmul.f32 %v218, %v218
        %v297 = vmul.f32 %v219, %v219
        %v298 = vadd.f32 %v218, %v219
        %299 = vadd.xlane.f32.xlu0 %v298
        %v300 = vpop.xlane.xlu0 %299
        %v301 = vrot.slane %v300, 4
        %v302 = vadd.f32 %v300, %v301
        %v303 = vrot.slane %v302, 2
        %v304 = vadd.f32 %v302, %v303
        %v305 = vrot.slane %v304, 1
        %v306 = vadd.f32 %v304, %v305
        %s307 = vtos %v306
        %v308 = vstv %s307
        %v309 = vadd.f32 %v296, %v297
        %310 = vadd.xlane.f32.xlu0 %v309
        %v311 = vpop.xlane.xlu0 %310
        %v312 = vrot.slane %v311, 4
        %v313 = vadd.f32 %v311, %v312
        %v314 = vrot.slane %v313, 2
        %v315 = vadd.f32 %v313, %v314
        %v316 = vrot.slane %v315, 1
        %v317 = vadd.f32 %v315, %v316
        %s318 = vtos %v317
        %v319 = vstv %s318
        %v320 = vmul.f32 %v308, 0.00048828125
        %v321 = vmul.f32 %v319, 0.00048828125
        %v322 = vmul.f32 %v320, %v320
        %v323 = vsub.f32 %v321, %v322
        %v324 = vadd.f32 %v323, 1e-05
        %v325 = vrsqrt.pop %v324
        %v326 = vmul.f32 %v325, %v324
        %v327 = vmul.f32 %v326, %v325
        %v328 = vmul.f32 0.5, %v327
        %v329 = vsub.f32 1.5, %v328
        %v330 = vmul.f32 %v325, %v329
        %vm331 = vweird.f32 %v324
        %vm332 = vweird.f32 %v325
        %vm333 = vmor %vm331, %vm332
        %v334 = vsel %vm333, %v325, %v330
        %v335 = vmul.f32 %v334, %v320
        %v336 = vld [vmem:[%s1] sm:$0xff]
        %v337 = vld [vmem:[#allocation2] sm:$0xff]
        %v338 = vld [vmem:[#allocation2 + $0x8] sm:$0xff]
        %v339 = vld [vmem:[#allocation2 + $0x10] sm:$0xff]
        %v340 = vld [vmem:[#allocation2 + $0x18] sm:$0xff]
        %v341 = vld [vmem:[#allocation2 + $0x20] sm:$0xff]
        %v342 = vld [vmem:[#allocation2 + $0x28] sm:$0xff]
        %v343 = vld [vmem:[#allocation2 + $0x30] sm:$0xff]
        %v344 = vld [vmem:[#allocation2 + $0x38] sm:$0xff]
        %v345 = vld [vmem:[#allocation2 + $0x40] sm:$0xff]
        %v346 = vld [vmem:[#allocation2 + $0x48] sm:$0xff]
        %v347 = vld [vmem:[#allocation2 + $0x50] sm:$0xff]
        %v348 = vld [vmem:[#allocation2 + $0x58] sm:$0xff]
        %v349 = vld [vmem:[#allocation2 + $0x60] sm:$0xff]
        %v350 = vld [vmem:[#allocation2 + $0x68] sm:$0xff]
        %v351 = vld [vmem:[#allocation2 + $0x70] sm:$0xff]
        %v352 = vld [vmem:[#allocation2 + $0x78] sm:$0xff]
        %v353 = vld [vmem:[#allocation2 + $0x80] sm:$0xff]
        %v354 = vld [vmem:[#allocation2 + $0x88] sm:$0xff]
        %vm355 = vcmask 588800
        %v357 = vsel %vm355, %v336, 0
        %359 = vmatpush.msra.mxu0 0.0
        %360 = vmatpush.msra.mxu0 0.0
        %361 = vmatpush.msra.mxu0 0.0
        %362 = vmatpush.msra.mxu0 0.0
        %363 = vmatpush.msra.mxu0 0.0
        %364 = vmatpush.msra.mxu0 0.0
        %365 = vmatpush.msra.mxu0 0.0
        %366 = vmatpush.msra.mxu0 %v353
        %367 = vmatpush.msra.mxu0 %v351
        %368 = vmatpush.msra.mxu0 %v349
        %369 = vmatpush.msra.mxu0 %v347
        %370 = vmatpush.msra.mxu0 %v345
        %371 = vmatpush.msra.mxu0 %v343
        %372 = vmatpush.msra.mxu0 %v341
        %373 = vmatpush.msra.mxu0 %v339
        %374 = vmatpush.msra.mxu0 %v337
        %375 = vmatmul.f32.gmra.mxu0 %v357
        %v376 = vpop.f32.mrf.mxu0
        %v377 = vadd.f32 0.0, %v376
        %378 = vdwg.mxu0
        %379 = vmatpush.msra.mxu0 0.0
        %380 = vmatpush.msra.mxu0 0.0
        %381 = vmatpush.msra.mxu0 0.0
        %382 = vmatpush.msra.mxu0 0.0
        %383 = vmatpush.msra.mxu0 0.0
        %384 = vmatpush.msra.mxu0 0.0
        %385 = vmatpush.msra.mxu0 0.0
        %386 = vmatpush.msra.mxu0 %v354
        %387 = vmatpush.msra.mxu0 %v352
        %388 = vmatpush.msra.mxu0 %v350
        %389 = vmatpush.msra.mxu0 %v348
        %390 = vmatpush.msra.mxu0 %v346
        %391 = vmatpush.msra.mxu0 %v344
        %392 = vmatpush.msra.mxu0 %v342
        %393 = vmatpush.msra.mxu0 %v340
        %394 = vmatpush.msra.mxu0 %v338
        %395 = vmatmul.f32.gmra.mxu0 %v357
        %v396 = vpop.f32.mrf.mxu0
        %v397 = vadd.f32 0.0, %v396
        %398 = vdwg.mxu0
        %v399 = vld [vmem:[%s2] sm:$0xff]
        %v400 = vmul.f32 %v334, %v377
        %v401 = vmul.f32 %v334, %v397
        %403 = vset.pattern.permute.xlu0 0
        %404 = vperm.xlu0 %403, %v399
        %v405 = vpop.permute.xlu0 %404
        %v407 = vmul.f32 %v335, %v405
        %v408 = vsub.f32 %v400, %v407
        %v409 = vsub.f32 %v401, %v407
        %410 = vset.pattern.permute.xlu0 1
        %411 = vperm.xlu0 %410, %v399
        %v412 = vpop.permute.xlu0 %411
        %v414 = vadd.f32 %v408, %v412
        %v415 = vadd.f32 %v409, %v412
        %v416 = vld [vmem:[%s3] sm:$0x3]
        %v418 = vperm.slane %v416, 0
        %v419 = vperm.slane %v416, 1
        %v422 = vmul.f32 %v414, %v418
        %v423 = vmul.f32 %v415, %v419
        %v424 = vmul.f32 %v422, 0.5
        %v425 = vmul.f32 %v423, 0.5
        %v426 = vmul.f32 %v422, 0.70710677
        %v427 = vmul.f32 %v423, 0.70710677
        %v428 = vmul.f32 %v426, %v426
        %v429 = vmin.f32 16.0, %v428
        %v430 = vmul.f32 %v429, 2.1237322e-06
        %v431 = vadd.f32 %v430, 0.00028619796
        %v432 = vmul.f32 %v429, %v431
        %v433 = vadd.f32 %v432, 0.0036580483
        %v434 = vmul.f32 %v429, %v433
        %v435 = vadd.f32 %v434, 0.05243302
        %v436 = vmul.f32 %v429, %v435
        %v437 = vadd.f32 %v436, 0.18741608
        %v438 = vmul.f32 %v429, %v437
        %v439 = vadd.f32 %v438, 1.1283791
        %v440 = vmul.f32 %v426, %v439
        %v441 = vmul.f32 %v429, 3.8918573e-05
        %v442 = vadd.f32 %v441, 0.001143296
        %v443 = vmul.f32 %v429, %v442
        %v444 = vadd.f32 %v443, 0.014752088
        %v445 = vmul.f32 %v429, %v444
        %v446 = vadd.f32 %v445, 0.112945676
        %v447 = vmul.f32 %v429, %v446
        %v448 = vadd.f32 %v447, 0.4994258
        %v449 = vmul.f32 %v429, %v448
        %v450 = vadd.f32 %v449, 1.0
        %v451 = vrcp.pop %v450
        %v452 = vmul.f32 %v450, %v451
        %v453 = vsub.f32 1.0, %v452
        %v454 = vmul.f32 %v451, %v453
        %v455 = vadd.f32 %v451, %v454
        %vm456 = vweird.f32 %v450
        %vm457 = vweird.f32 %v451
        %vm458 = vmor %vm456, %vm457
        %v459 = vsel %vm458, %v451, %v455
        %v460 = vand.u32 2147483647, %v450
        %vm461 = vcmp.eq.f32.partialorder %v460, 8.507059e+37
        %v462 = vand.u32 %v450, 2147483648
        %v463 = vor.u32 1.1754944e-38, %v462
        %v464 = vsel %vm461, %v463, %v459
        %v465 = vmul.f32 %v440, %v464
        %v466 = vmin.f32 %v465, 1.0
        %v467 = vmax.f32 %v466, -1.0
        %v468 = vmul.f32 %v427, %v427
        %v469 = vmin.f32 16.0, %v468
        %v470 = vmul.f32 %v469, 2.1237322e-06
        %v471 = vadd.f32 %v470, 0.00028619796
        %v472 = vmul.f32 %v469, %v471
        %v473 = vadd.f32 %v472, 0.0036580483
        %v474 = vmul.f32 %v469, %v473
        %v475 = vadd.f32 %v474, 0.05243302
        %v476 = vmul.f32 %v469, %v475
        %v477 = vadd.f32 %v476, 0.18741608
        %v478 = vmul.f32 %v469, %v477
        %v479 = vadd.f32 %v478, 1.1283791
        %v480 = vmul.f32 %v427, %v479
        %v481 = vmul.f32 %v469, 3.8918573e-05
        %v482 = vadd.f32 %v481, 0.001143296
        %v483 = vmul.f32 %v469, %v482
        %v484 = vadd.f32 %v483, 0.014752088
        %v485 = vmul.f32 %v469, %v484
        %v486 = vadd.f32 %v485, 0.112945676
        %v487 = vmul.f32 %v469, %v486
        %v488 = vadd.f32 %v487, 0.4994258
        %v489 = vmul.f32 %v469, %v488
        %v490 = vadd.f32 %v489, 1.0
        %v491 = vrcp.pop %v490
        %v492 = vmul.f32 %v490, %v491
        %v493 = vsub.f32 1.0, %v492
        %v494 = vmul.f32 %v491, %v493
        %v495 = vadd.f32 %v491, %v494
        %vm496 = vweird.f32 %v490
        %vm497 = vweird.f32 %v491
        %vm498 = vmor %vm496, %vm497
        %v499 = vsel %vm498, %v491, %v495
        %v500 = vand.u32 2147483647, %v490
        %vm501 = vcmp.eq.f32.partialorder %v500, 8.507059e+37
        %v502 = vand.u32 %v490, 2147483648
        %v503 = vor.u32 1.1754944e-38, %v502
        %v504 = vsel %vm501, %v503, %v499
        %v505 = vmul.f32 %v480, %v504
        %v506 = vmin.f32 %v505, 1.0
        %v507 = vmax.f32 %v506, -1.0
        %v508 = vadd.f32 %v467, 1.0
        %v509 = vadd.f32 %v507, 1.0
        %v510 = vmul.f32 %v424, %v508
        %v511 = vmul.f32 %v425, %v509
        %512 = vset.pattern.permute.xlu0 2
        %513 = vperm.xlu0 %512, %v399
        %v514 = vpop.permute.xlu0 %513
        %v516 = vmul.f32 %v514, %v510
        %v517 = vmul.f32 %v514, %v511
        %518 = vset.pattern.permute.xlu0 3
        %519 = vperm.xlu0 %518, %v399
        %v520 = vpop.permute.xlu0 %519
        %v522 = vmul.f32 %v520, %v218
        %v523 = vmul.f32 %v520, %v219
        %v524 = vadd.f32 %v516, %v522
        %v525 = vadd.f32 %v517, %v523
        %526 = vst [vmem:[%s215] sm:$0xff] %v524
        %527 = vst [vmem:[%s215 + $0x8] sm:$0xff] %v525
        %s528 = sand.u32 %s118, 1
        %s529 = scalar_lea.sflag [#allocation5], %s528
        %s530 = sand.u32 %s118, 1
        %s531 = smul.addr %s530, 16
        %s532 = scalar_lea.vmem [#allocation6], %s531
        // Predicated region
        $region41: #{tpu_custom_call.1} parent=35 // pred_check
          %p533 = pneg %p128
        $region42: #{tpu_custom_call.1} parent=35 // pred_check_branch
          %535 = sbr.rel (%p533) target = $region44
        $region43: #{tpu_custom_call.1} parent=35 // pred_region
          %s536 = smul.u32 2, %s21
          %538 = vsyncadd %s529, 0
          %s539 = smul.addr %s536, 8
          %s540 = scalar_lea.hbm %s4, %s539
          %s542 = sshll.u32 %s532, 4
          %s543 = int_to_ptr.vmem [resolvable:$true] %s542
          %s544 = sshll.u32 %s540, 4
          %s545 = int_to_ptr.hbm [resolvable:$true] %s544
          %547 = dma.vmem_to_hbm [thread:$0]  %s543, 256, %s545, %s529
        $region44: #{tpu_custom_call.1} parent=35 // pred_fallthru
          _
      $region36: #{tpu_custom_call.1} parent=5 // pred_fallthru
        _
      %p548 = scmp.le.s32.totalorder 2, %s16
      // Predicated region
      $region45: #{tpu_custom_call.1} parent=5 // pred_check
        %p549 = pneg %p548
      $region46: #{tpu_custom_call.1} parent=5 // pred_check_branch
        %551 = sbr.rel (%p549) target = $region48
      $region47: #{tpu_custom_call.1} parent=5 // pred_region
        %s552 = ssub.s32 %s16, 2
        // Predicated region
        $region49: #{tpu_custom_call.1} parent=47 // pred_check
          %p553 = pneg %p134
        $region50: #{tpu_custom_call.1} parent=47 // pred_check_branch
          %555 = sbr.rel (%p553) target = $region52
        $region51: #{tpu_custom_call.1} parent=47 // pred_region
          %s556 = sand.u32 %s119, 1
          %s557 = scalar_lea.sflag [#allocation5], %s556
          %s558 = sand.u32 %s119, 1
          %s559 = smul.addr %s558, 16
          %s560 = scalar_lea.vmem [#allocation6], %s559
          %562 = dma.done %s557, 256
        $region52: #{tpu_custom_call.1} parent=47 // pred_fallthru
          _
      $region48: #{tpu_custom_call.1} parent=5 // pred_fallthru
        _
    $region6: #{tpu_custom_call.1} parent=1 // loop_footer
      %s20 = sadd.s32 1, %s16
    $region7: #{tpu_custom_call.1} parent=1 // loop_footer_branch
      %15 = sbr.rel target = $region3
    $region8: #{tpu_custom_call.1} parent=1 // loop_exit
      _
    %563 = vsyncpa [#allocation4], 1
    %s564 = scalar_lea.sflag [#allocation4], 1
    %565 = vsyncpa %s564, 1
    %566 = vsyncpa [#allocation5], 1
    %s567 = scalar_lea.sflag [#allocation5], 1
    %568 = vsyncpa %s567, 1

</llo_original>
